<compile_context>
chip_gen: v5e
topology: v5e:2x2
jax: 0.10.0
libtpu: 0.0.40
codegen_flags: <defaults>
</compile_context>

<pallas_src>
import functools

import numpy as np
import jax
import jax.numpy as jnp
from jax import lax
from jax.experimental import pallas as pl
from jax.experimental.pallas import tpu as pltpu


def _round_up(v, m):
    return ((v + m - 1) // m) * m


def _choose_k(Kd):
    """Reduction-dim padding / tile: single K step up to 2048, else TK=512."""
    if Kd <= 128:
        return 128, 128
    if Kd <= 2048:
        Kp = _round_up(Kd, 256)
        return Kp, Kp
    TK = 512
    return _round_up(Kd, TK), TK


def _choose_n(Cout):
    """Lane (Cout) padding / tile: single tile up to 1024 lanes, else TN=512."""
    Np = _round_up(Cout, 128)
    if Np <= 1024:
        return Np, Np
    TN = 512
    return _round_up(Cout, TN), TN


# ----------------------------------------------------------------------------
# Pallas kernel 1: lane-dense tiled matmul + bias (+ optional fused ReLU)
#                  ==  Conv1d (im2col rows, Cout on the lane axis)
# ----------------------------------------------------------------------------
def _matmul_bias_kernel(x_ref, w_ref, b_ref, o_ref, acc_ref, *, apply_relu):
    k = pl.program_id(1)

    @pl.when(k == 0)
    def _():
        acc_ref[...] = jnp.zeros_like(acc_ref)

    acc_ref[...] += jnp.dot(x_ref[...], w_ref[...],
                            preferred_element_type=jnp.float32)

    @pl.when(k == pl.num_programs(1) - 1)
    def _():
        out = acc_ref[...] + b_ref[...]          # (Mp, TN) + (1, TN)
        if apply_relu:
            out = jnp.maximum(out, 0.0)
        o_ref[...] = out.astype(o_ref.dtype)


@functools.lru_cache(maxsize=None)
def _build_conv_matmul(Mp, Kp, TK, Np, TN, apply_relu):
    kernel = functools.partial(_matmul_bias_kernel, apply_relu=apply_relu)
    nN = Np // TN
    nK = Kp // TK
    f = pl.pallas_call(
        kernel,
        out_shape=jax.ShapeDtypeStruct((Mp, Np), jnp.float32),
        grid_spec=pltpu.PrefetchScalarGridSpec(
            num_scalar_prefetch=0,
            grid=(nN, nK),
            in_specs=[
                pl.BlockSpec((Mp, TK), lambda j, k: (0, k)),   # Xcol rows
                pl.BlockSpec((TK, TN), lambda j, k: (k, j)),   # W (Kd, Cout)
                pl.BlockSpec((1, TN), lambda j, k: (0, j)),    # bias
            ],
            out_specs=pl.BlockSpec((Mp, TN), lambda j, k: (0, j)),
            scratch_shapes=[pltpu.VMEM((Mp, TN), jnp.float32)],
        ),
        compiler_params=pltpu.CompilerParams(
            dimension_semantics=("parallel", "arbitrary")),
    )
    return jax.jit(f)


def conv1d_nlc(x, w, b=None, stride=1, padding=0, apply_relu=False):
    """PyTorch-equivalent Conv1d with activations in NLC layout.

    x: (B, L, Cin) float32   w: (Cout, Cin, K) (PyTorch layout)   b: (Cout,)|None
    returns (B, Lout, Cout) float32
    """
    B, L, Cin = x.shape
    Cout, Cin2, K = w.shape
    assert Cin == Cin2
    Lout = (L + 2 * padding - K) // stride + 1

    xb = x.astype(jnp.bfloat16)
    if padding:
        xb = jnp.pad(xb, ((0, 0), (padding, padding), (0, 0)))
    if K == 1 and stride == 1:
        xcol = xb                                           # (B, Lout, Cin)
    else:
        xcol = jnp.concatenate(
            [xb[:, j: j + stride * (Lout - 1) + 1: stride, :] for j in range(K)],
            axis=-1)                                        # (B, Lout, K*Cin)
    Kd = K * Cin
    xmat = xcol.reshape(B * Lout, Kd)

    # weight: (Cout, Cin, K) -> (K, Cin, Cout) -> (Kd, Cout); column order of
    # xcol is k-major / cin-minor, so this matches exactly.
    wmat = jnp.transpose(w.astype(jnp.bfloat16), (2, 1, 0)).reshape(Kd, Cout)
    if b is None:
        b = jnp.zeros((Cout,), jnp.float32)

    M = B * Lout
    Mp = _round_up(M, 8)
    Kp, TK = _choose_k(Kd)
    Np, TN = _choose_n(Cout)

    x_pad = jnp.pad(xmat, ((0, Mp - M), (0, Kp - Kd)))
    w_pad = jnp.pad(wmat, ((0, Kp - Kd), (0, Np - Cout)))
    b_pad = jnp.pad(b.astype(jnp.float32), (0, Np - Cout)).reshape(1, Np)

    f = _build_conv_matmul(Mp, Kp, TK, Np, TN, bool(apply_relu))
    out = f(x_pad, w_pad, b_pad)                 # (Mp, Np) f32
    return out[:M, :Cout].reshape(B, Lout, Cout)


# ----------------------------------------------------------------------------
# Pallas kernel 2: External-attention softmax(over length) + key normalization
# (NLC layout: softmax over axis=1 (length), renorm over axis=2 (64 keys))
# ----------------------------------------------------------------------------
def _attn_norm_kernel(a_ref, o_ref):
    a = a_ref[0]                                          # (L, 64)
    a = a - jnp.max(a, axis=0, keepdims=True)
    e = jnp.exp(a)
    sm = e * pl.reciprocal(jnp.sum(e, axis=0, keepdims=True), approx=True)
    denom = 1e-9 + jnp.sum(sm, axis=1, keepdims=True)     # sum over 64 keys
    o_ref[0] = sm * pl.reciprocal(denom, approx=True)


@functools.lru_cache(maxsize=None)
def _build_attn_norm(B, L, Kc):
    f = pl.pallas_call(
        _attn_norm_kernel,
        out_shape=jax.ShapeDtypeStruct((B, L, Kc), jnp.float32),
        grid=(B,),
        in_specs=[pl.BlockSpec((1, L, Kc), lambda b: (b, 0, 0))],
        out_specs=pl.BlockSpec((1, L, Kc), lambda b: (b, 0, 0)),
    )
    return jax.jit(f)


def attn_normalize(a):
    B, L, Kc = a.shape
    return _build_attn_norm(B, L, Kc)(a)


# ----------------------------------------------------------------------------
# Plain-JAX glue (NLC layout): BatchNorm (training-mode batch stats), pooling
# ----------------------------------------------------------------------------
def batchnorm_train(x, gamma, beta, eps=1e-5):
    # torch.nn.BatchNorm1d in training mode (module default right after init):
    # per-channel batch statistics over (N, L), biased variance.  Channels last.
    mean = jnp.mean(x, axis=(0, 1), keepdims=True)
    var = jnp.mean(jnp.square(x - mean), axis=(0, 1), keepdims=True)
    xhat = (x - mean) * lax.rsqrt(var + eps)
    return xhat * gamma[None, None, :] + beta[None, None, :]


def maxpool1d_3_2_1(x):
    B, L, C = x.shape
    xp = jnp.pad(x, ((0, 0), (1, 1), (0, 0)), constant_values=-np.inf)
    Lout = (L + 2 - 3) // 2 + 1
    wins = jnp.stack(
        [xp[:, j: j + 2 * (Lout - 1) + 1: 2, :] for j in range(3)], axis=0)
    return jnp.max(wins, axis=0)


def avgpool1d_2(x):
    B, L, C = x.shape
    Lo = L // 2
    return x[:, :2 * Lo, :].reshape(B, Lo, 2, C).mean(axis=2)


# ----------------------------------------------------------------------------
# Deterministic parameter initialisation (shapes taken from __init__)
# ----------------------------------------------------------------------------
class KeyGen:
    def __init__(self, key):
        self.key = key
        self.i = 0

    def __call__(self):
        self.i += 1
        return jax.random.fold_in(self.key, self.i)


def _conv_init(key, cout, cin, k, bias=True):
    kw, kb = jax.random.split(key)
    bound = 1.0 / np.sqrt(cin * k)
    w = jax.random.uniform(kw, (cout, cin, k), jnp.float32, -bound, bound)
    b = (jax.random.uniform(kb, (cout,), jnp.float32, -bound, bound)
         if bias else None)
    return w, b


def _bn_init(c):
    return jnp.ones((c,), jnp.float32), jnp.zeros((c,), jnp.float32)


def init_dense_layer(kg, in_c, mid=128, out=32):
    p = {}
    p['bn1_g'], p['bn1_b'] = _bn_init(in_c)
    p['w1'], p['b1'] = _conv_init(kg(), mid, in_c, 3)
    p['bn2_g'], p['bn2_b'] = _bn_init(mid)
    p['w2'], p['b2'] = _conv_init(kg(), out, mid, 5)
    return p


def init_dense_block(kg, layer_num, growth, in_c, mid=128):
    return [init_dense_layer(kg, in_c + i * growth, mid, growth)
            for i in range(layer_num)]


def init_attn(kg, c):
    p = {}
    p['conv1_w'], _ = _conv_init(kg(), c, c, 1, bias=False)
    p['lin0_w'], _ = _conv_init(kg(), 64, c, 1, bias=False)
    p['lin1_w'], _ = _conv_init(kg(), c, 64, 1, bias=False)
    p['conv2_w'], _ = _conv_init(kg(), c, c, 1, bias=False)
    return p


def init_transition(kg, c):
    p = {}
    p['bn_g'], p['bn_b'] = _bn_init(c)
    p['w'], p['b'] = _conv_init(kg(), c // 2, c, 3)
    return p


def init_densenet(key, layer_num=(6, 12, 24, 16), growth=32, init_features=64,
                  in_channels=1, mid=128):
    kg = KeyGen(key)
    p = {}
    fc = init_features
    p['stem_w'], p['stem_b'] = _conv_init(kg(), fc, in_channels, 7)
    p['norm_g'], p['norm_b'] = _bn_init(fc)
    p['db1'] = init_dense_block(kg, layer_num[0], growth, fc, mid)
    fc = fc + layer_num[0] * growth                       # 256
    p['attn1'] = init_attn(kg, fc)
    p['trans1'] = init_transition(kg, fc)
    p['db2'] = init_dense_block(kg, layer_num[1], growth, fc // 2, mid)
    fc = fc // 2 + layer_num[1] * growth                  # 512
    p['attn2'] = init_attn(kg, fc)
    p['trans2'] = init_transition(kg, fc)
    p['db3'] = init_dense_block(kg, layer_num[2], growth, fc // 2, mid)
    fc = fc // 2 + layer_num[2] * growth                  # 1024
    p['attn3'] = init_attn(kg, fc)
    # output head (input channels 1174 = 1024 features + 150 residual samples)
    p['out_w0'], p['out_b0'] = _conv_init(kg(), 1174, 1174, 1)
    p['out_w1'], p['out_b1'] = _conv_init(kg(), 3000, 1174, 3)
    p['out_w2'], p['out_b2'] = _conv_init(kg(), 3000, 3000, 1)
    p['out_w3'], p['out_b3'] = _conv_init(kg(), 3000, 3000, 3)
    return p


# ----------------------------------------------------------------------------
# Forward pass (mirrors the PyTorch module; activations kept in NLC layout)
# ----------------------------------------------------------------------------
def dense_layer_forward(p, x):
    h = jax.nn.relu(batchnorm_train(x, p['bn1_g'], p['bn1_b']))
    h = conv1d_nlc(h, p['w1'], p['b1'], stride=1, padding=1)
    h = jax.nn.relu(batchnorm_train(h, p['bn2_g'], p['bn2_b']))
    h = conv1d_nlc(h, p['w2'], p['b2'], stride=1, padding=2)
    return jnp.concatenate([x, h], axis=-1)


def external_attention_forward(p, x):
    idn = x
    h = conv1d_nlc(x, p['conv1_w'])
    attn = conv1d_nlc(h, p['lin0_w'])
    attn = attn_normalize(attn)            # softmax over length, /(1e-9+sum_k)
    h = conv1d_nlc(attn, p['lin1_w'])
    h = conv1d_nlc(h, p['conv2_w'])
    return jax.nn.relu(h + idn)


def transition_forward(p, x):
    h = jax.nn.relu(batchnorm_train(x, p['bn_g'], p['bn_b']))
    h = conv1d_nlc(h, p['w'], p['b'], stride=1, padding=1)
    return avgpool1d_2(h)


def densenet_forward(params, x):
    B = x.shape[0]
    residual = x.reshape(B, 1, -1)                # NLC: (B, 1, 150) = 150 ch @ L=1
    h = x.reshape(B, -1, 1)                       # NLC: (B, 150, 1)
    h = conv1d_nlc(h, params['stem_w'], params['stem_b'], stride=2, padding=3)
    h = jax.nn.relu(batchnorm_train(h, params['norm_g'], params['norm_b']))
    h = maxpool1d_3_2_1(h)                        # (B, 38, 64)
    for lp in params['db1']:
        h = dense_layer_forward(lp, h)            # (B, 38, 256)
    h = external_attention_forward(params['attn1'], h)
    h = transition_forward(params['trans1'], h)   # (B, 19, 128)
    for lp in params['db2']:
        h = dense_layer_forward(lp, h)            # (B, 19, 512)
    h = external_attention_forward(params['attn2'], h)
    h = transition_forward(params['trans2'], h)   # (B, 9, 256)
    for lp in params['db3']:
        h = dense_layer_forward(lp, h)            # (B, 9, 1024)
    h = external_attention_forward(params['attn3'], h)
    h = jnp.mean(h, axis=1, keepdims=True)        # AdaptiveAvgPool1d(1) -> (B,1,1024)
    h = jnp.concatenate([h, residual], axis=-1)   # (B, 1, 1174)
    h = conv1d_nlc(h, params['out_w0'], params['out_b0'], apply_relu=True)
    h = conv1d_nlc(h, params['out_w1'], params['out_b1'], padding=1, apply_relu=True)
    h = conv1d_nlc(h, params['out_w2'], params['out_b2'], apply_relu=True)
    h = conv1d_nlc(h, params['out_w3'], params['out_b3'], padding=1)
    return h.reshape(B, -1)                       # (B, 3000)


# ----------------------------------------------------------------------------
if __name__ == "__main__":
    key = jax.random.PRNGKey(0)
    params = init_densenet(key)

    # Input: (batch=2, 150 samples).  The head's 1174 input channels force the
    # sequence length to be 150 (1024 dense features + 150 residual samples).
    x = jax.random.normal(jax.random.fold_in(key, 12345), (2, 150), jnp.float32)

    # Self-check 1: Pallas conv (stride 1, K=3) against XLA's native conv.
    xs = jax.random.normal(jax.random.fold_in(key, 7), (2, 16, 40), jnp.float32)
    ws = jax.random.normal(jax.random.fold_in(key, 8), (24, 16, 3), jnp.float32) * 0.1
    bs = jax.random.normal(jax.random.fold_in(key, 9), (24,), jnp.float32) * 0.1
    ref = lax.conv_general_dilated(
        xs, ws, window_strides=(1,), padding=((1, 1),),
        dimension_numbers=("NCH", "OIH", "NCH")) + bs[None, :, None]
    got = conv1d_nlc(jnp.transpose(xs, (0, 2, 1)), ws, bs, stride=1, padding=1)
    got = jnp.transpose(got, (0, 2, 1))
    np.testing.assert_allclose(np.asarray(got), np.asarray(ref),
                               rtol=2e-2, atol=2e-2)

    # Self-check 2: strided conv (stem-style: K=7, stride=2, pad=3).
    xs2 = jax.random.normal(jax.random.fold_in(key, 17), (2, 4, 30), jnp.float32)
    ws2 = jax.random.normal(jax.random.fold_in(key, 18), (8, 4, 7), jnp.float32) * 0.1
    bs2 = jax.random.normal(jax.random.fold_in(key, 19), (8,), jnp.float32) * 0.1
    ref2 = lax.conv_general_dilated(
        xs2, ws2, window_strides=(2,), padding=((3, 3),),
        dimension_numbers=("NCH", "OIH", "NCH")) + bs2[None, :, None]
    got2 = conv1d_nlc(jnp.transpose(xs2, (0, 2, 1)), ws2, bs2, stride=2, padding=3)
    got2 = jnp.transpose(got2, (0, 2, 1))
    np.testing.assert_allclose(np.asarray(got2), np.asarray(ref2),
                               rtol=2e-2, atol=2e-2)

    out = densenet_forward(params, x)
    out = jax.block_until_ready(out)
    assert out.shape == (2, 3000), out.shape
    assert np.all(np.isfinite(np.asarray(out)))
    print("KERNEL_OK")
</pallas_src>

<mosaic_0001>
module attributes {stable_mosaic.version = 11 : i64} {
  func.func @_matmul_bias_kernel(%arg0: i32, %arg1: i32, %arg2: memref<80x128xbf16, #tpu.memory_space<vmem>>, %arg3: memref<128x128xbf16, #tpu.memory_space<vmem>>, %arg4: memref<1x128xf32, #tpu.memory_space<vmem>>, %arg5: memref<80x128xf32, #tpu.memory_space<vmem>>, %arg6: memref<80x128xf32, #tpu.memory_space<vmem>>) attributes {dimension_semantics = [#tpu.dimension_semantics<parallel>, #tpu.dimension_semantics<arbitrary>], iteration_bounds = array<i64: 1, 1>, scalar_prefetch = 0 : i64, scratch_operands = 1 : i64, tpu.core_type = #tpu.core_type<tc>, window_params = [{transform_indices = @transform_0, window_bounds = array<i64: 80, 128>}, {transform_indices = @transform_1, window_bounds = array<i64: 128, 128>}, {transform_indices = @transform_2, window_bounds = array<i64: 1, 128>}, {transform_indices = @transform_3, window_bounds = array<i64: 80, 128>}]} {
    %c0_i32 = arith.constant 0 : i32
    %0 = arith.cmpi eq, %arg1, %c0_i32 : i32
    %1 = arith.extui %0 : i1 to i32
    %c0_i32_0 = arith.constant 0 : i32
    %2 = arith.cmpi ne, %1, %c0_i32_0 : i32
    scf.if %2 {
      %cst_10 = arith.constant 0.000000e+00 : f32
      %12 = vector.broadcast %cst_10 : f32 to vector<80x128xf32>
      %c0_11 = arith.constant 0 : index
      %c0_12 = arith.constant 0 : index
      %13 = vector.load %arg6[%c0_11, %c0_12] : memref<80x128xf32, #tpu.memory_space<vmem>>, vector<80x128xf32>
      tpu.vector_store %arg6[%c0_11, %c0_12], %12 {strides = array<i32>} : memref<80x128xf32, #tpu.memory_space<vmem>>, vector<80x128xf32>,
    } else {
    }
    %c0 = arith.constant 0 : index
    %c0_1 = arith.constant 0 : index
    %3 = vector.load %arg6[%c0, %c0_1] : memref<80x128xf32, #tpu.memory_space<vmem>>, vector<80x128xf32>
    %c0_2 = arith.constant 0 : index
    %c0_3 = arith.constant 0 : index
    %4 = vector.load %arg2[%c0_2, %c0_3] : memref<80x128xbf16, #tpu.memory_space<vmem>>, vector<80x128xbf16>
    %c0_4 = arith.constant 0 : index
    %c0_5 = arith.constant 0 : index
    %5 = vector.load %arg3[%c0_4, %c0_5] : memref<128x128xbf16, #tpu.memory_space<vmem>>, vector<128x128xbf16>
    %cst = arith.constant dense<0.000000e+00> : vector<80x128xf32>
    %6 = tpu.matmul %4, %5, %cst {dimension_numbers = #tpu.dot_dimension_numbers<[1], [0], [0], [1], [0, 0, 1, 1], [], []>} : vector<80x128xbf16>, vector<128x128xbf16>, vector<80x128xf32> -> vector<80x128xf32>
    %7 = arith.addf %3, %6 : vector<80x128xf32>
    %c0_6 = arith.constant 0 : index
    %c0_7 = arith.constant 0 : index
    %8 = vector.load %arg6[%c0_6, %c0_7] : memref<80x128xf32, #tpu.memory_space<vmem>>, vector<80x128xf32>
    tpu.vector_store %arg6[%c0_6, %c0_7], %7 {strides = array<i32>} : memref<80x128xf32, #tpu.memory_space<vmem>>, vector<80x128xf32>,
    %c0_i32_8 = arith.constant 0 : i32
    %9 = arith.cmpi eq, %arg1, %c0_i32_8 : i32
    %10 = arith.extui %9 : i1 to i32
    %c0_i32_9 = arith.constant 0 : i32
    %11 = arith.cmpi ne, %10, %c0_i32_9 : i32
    scf.if %11 {
      %c0_10 = arith.constant 0 : index
      %c0_11 = arith.constant 0 : index
      %12 = vector.load %arg6[%c0_10, %c0_11] : memref<80x128xf32, #tpu.memory_space<vmem>>, vector<80x128xf32>
      %c0_12 = arith.constant 0 : index
      %c0_13 = arith.constant 0 : index
      %13 = vector.load %arg4[%c0_12, %c0_13] : memref<1x128xf32, #tpu.memory_space<vmem>>, vector<1x128xf32>
      %14 = vector.broadcast %13 : vector<1x128xf32> to vector<80x128xf32>
      %15 = arith.addf %12, %14 : vector<80x128xf32>
      %c0_14 = arith.constant 0 : index
      %c0_15 = arith.constant 0 : index
      %16 = vector.load %arg5[%c0_14, %c0_15] : memref<80x128xf32, #tpu.memory_space<vmem>>, vector<80x128xf32>
      tpu.vector_store %arg5[%c0_14, %c0_15], %15 {strides = array<i32>} : memref<80x128xf32, #tpu.memory_space<vmem>>, vector<80x128xf32>,
    } else {
    }
    return
  }
  func.func @transform_0(%arg0: i32, %arg1: i32) -> (i32, i32) {
    %c0_i32 = arith.constant 0 : i32
    %c0_i32_0 = arith.constant 0 : i32
    return %c0_i32, %arg1 : i32, i32
  }
  func.func @transform_1(%arg0: i32, %arg1: i32) -> (i32, i32) {
    %c0_i32 = arith.constant 0 : i32
    return %arg1, %arg0 : i32, i32
  }
  func.func @transform_2(%arg0: i32, %arg1: i32) -> (i32, i32) {
    %c0_i32 = arith.constant 0 : i32
    %c0_i32_0 = arith.constant 0 : i32
    return %c0_i32, %arg0 : i32, i32
  }
  func.func @transform_3(%arg0: i32, %arg1: i32) -> (i32, i32) {
    %c0_i32 = arith.constant 0 : i32
    %c0_i32_0 = arith.constant 0 : i32
    return %c0_i32, %arg0 : i32, i32
  }
}

</mosaic_0001>

<llo_original>
// kernel: tpu_custom_call.1
$region0: #{tpu_custom_call.1}
  #allocation0 [shape = 'u32[]', space=smem, size = 0x4, offset = 0x4, fixed_abs, tag = 'smem constant byte address 0x4 - core index']
  #allocation1 [shape = 'u32[72,128]{1,0:T(1,128)}', space=vmem, size = 0x9000, scoped, tag = 'internal scratch']
  #allocation2 [shape = 'f32[80,128]{1,0:T(8,128)}', space=vmem, size = 0xa000, scoped, tag = 'scratch operand']
  %s0 = inlined_call_operand.hbm [shape: bf16[80,128], index: 0, kind: input, shape index: {}]
  %s1 = inlined_call_operand.hbm [shape: bf16[128,128], index: 1, kind: input, shape index: {}]
  %s2 = inlined_call_operand.vmem [shape: f32[1,128], index: 2, kind: input, shape index: {}]
  %s3 = inlined_call_operand.hbm [shape: f32[80,128], index: 3, kind: output, shape index: {}]
  %s4 = sld [smem:[#allocation0]]
  $region38: #{tpu_custom_call.1} parent=0
    _
  %s6 = ssub.s32 1, %s4
  %s7 = scalar_select 0, %s6, %s4
  $region1: #{tpu_custom_call.1} parent=0
    #allocation3 [shape = 'u8[20480]{0}', space=vmem, size = 0x5000, scoped, tag = 'input window, operand 0, single buffered']
    #allocation4 [shape = 's32[1]{0}', space=sflag, size = 0x4, scoped, tag = 'scoped memory for tpu_custom_call.1']
    #allocation5 [shape = 's32[1]{0}', space=sflag, size = 0x4, scoped, tag = 'scoped memory for tpu_custom_call.1']
    #allocation6 [shape = 'u8[32768]{0}', space=vmem, size = 0x8000, scoped, tag = 'input window, operand 1, single buffered']
    #allocation7 [shape = 's32[1]{0}', space=sflag, size = 0x4, scoped, tag = 'scoped memory for tpu_custom_call.1']
    #allocation8 [shape = 'u8[40960]{0}', space=vmem, size = 0xa000, scoped, tag = 'output window, operand 0, single buffered']
    %8 = vsyncpa [#allocation4], 0
    %9 = vsyncpa [#allocation7], 0
    %10 = vsyncpa [#allocation5], 0
    // Predicated region
    $region2: #{tpu_custom_call.1} parent=1 // pred_check
      _
    $region3: #{tpu_custom_call.1} parent=1 // pred_check_branch
      %12 = sbr.rel (0) target = $region5
    $region4: #{tpu_custom_call.1} parent=1 // pred_region
      %14 = vsyncadd [#allocation4], 0
      %s15 = sshll.u32 %s0, 4
      %s16 = int_to_ptr.hbm [resolvable:$true] %s15
      %s17 = sshll.u32 [#allocation3], 4
      %s18 = int_to_ptr.vmem [resolvable:$true] %s17
      %23 = dma.hbm_to_vmem [thread:$0]  %s16, 640, %s18, [#allocation4], 64, 64, 4
    $region5: #{tpu_custom_call.1} parent=1 // pred_fallthru
      _
    // Predicated region
    $region6: #{tpu_custom_call.1} parent=1 // pred_check
      _
    $region7: #{tpu_custom_call.1} parent=1 // pred_check_branch
      %25 = sbr.rel (0) target = $region9
    $region8: #{tpu_custom_call.1} parent=1 // pred_region
      %27 = vsyncadd [#allocation7], 0
      %s28 = sshll.u32 %s1, 4
      %s29 = int_to_ptr.hbm [resolvable:$true] %s28
      %s30 = sshll.u32 [#allocation6], 4
      %s31 = int_to_ptr.vmem [resolvable:$true] %s30
      %36 = dma.hbm_to_vmem [thread:$0]  %s29, 1024, %s31, [#allocation7], 64, 64, 4
    $region9: #{tpu_custom_call.1} parent=1 // pred_fallthru
      _
    // Predicated region
    $region10: #{tpu_custom_call.1} parent=1 // pred_check
      _
    $region11: #{tpu_custom_call.1} parent=1 // pred_check_branch
      %38 = sbr.rel (0) target = $region13
    $region12: #{tpu_custom_call.1} parent=1 // pred_region
      _
    $region13: #{tpu_custom_call.1} parent=1 // pred_fallthru
      _
    // Predicated region
    $region14: #{tpu_custom_call.1} parent=1 // pred_check
      _
    $region15: #{tpu_custom_call.1} parent=1 // pred_check_branch
      %40 = sbr.rel (0) target = $region17
    $region16: #{tpu_custom_call.1} parent=1 // pred_region
      %42 = dma.done [#allocation4], 640
    $region17: #{tpu_custom_call.1} parent=1 // pred_fallthru
      _
    // Predicated region
    $region18: #{tpu_custom_call.1} parent=1 // pred_check
      _
    $region19: #{tpu_custom_call.1} parent=1 // pred_check_branch
      %44 = sbr.rel (0) target = $region21
    $region20: #{tpu_custom_call.1} parent=1 // pred_region
      %46 = dma.done [#allocation7], 1024
    $region21: #{tpu_custom_call.1} parent=1 // pred_fallthru
      _
    %p47 = scmp.eq.s32.totalorder 0, 0
    // Predicated region
    $region22: #{tpu_custom_call.1} parent=1 // pred_check
      %p48 = pneg %p47
    $region23: #{tpu_custom_call.1} parent=1 // pred_check_branch
      %50 = sbr.rel (%p48) target = $region25
    $region24: #{tpu_custom_call.1} parent=1 // pred_region
      %51 = vst [vmem:[#allocation2] sm:$0xff] 0.0
      %52 = vst [vmem:[#allocation2 + $0x8] sm:$0xff] 0.0
      %53 = vst [vmem:[#allocation2 + $0x10] sm:$0xff] 0.0
      %54 = vst [vmem:[#allocation2 + $0x18] sm:$0xff] 0.0
      %55 = vst [vmem:[#allocation2 + $0x20] sm:$0xff] 0.0
      %56 = vst [vmem:[#allocation2 + $0x28] sm:$0xff] 0.0
      %57 = vst [vmem:[#allocation2 + $0x30] sm:$0xff] 0.0
      %58 = vst [vmem:[#allocation2 + $0x38] sm:$0xff] 0.0
      %59 = vst [vmem:[#allocation2 + $0x40] sm:$0xff] 0.0
      %60 = vst [vmem:[#allocation2 + $0x48] sm:$0xff] 0.0
    $region25: #{tpu_custom_call.1} parent=1 // pred_fallthru
      _
    %v61 = vld [vmem:[#allocation2] sm:$0xff]
    %v62 = vld [vmem:[#allocation2 + $0x8] sm:$0xff]
    %v63 = vld [vmem:[#allocation2 + $0x10] sm:$0xff]
    %v64 = vld [vmem:[#allocation2 + $0x18] sm:$0xff]
    %v65 = vld [vmem:[#allocation2 + $0x20] sm:$0xff]
    %v66 = vld [vmem:[#allocation2 + $0x28] sm:$0xff]
    %v67 = vld [vmem:[#allocation2 + $0x30] sm:$0xff]
    %v68 = vld [vmem:[#allocation2 + $0x38] sm:$0xff]
    %v69 = vld [vmem:[#allocation2 + $0x40] sm:$0xff]
    %v70 = vld [vmem:[#allocation2 + $0x48] sm:$0xff]
    %v71 = vld [vmem:[#allocation3] sm:$0xf]
    %v72 = vld [vmem:[#allocation3 + $0x4] sm:$0xf]
    %v73 = vld [vmem:[#allocation3 + $0x8] sm:$0xf]
    %v74 = vld [vmem:[#allocation3 + $0xc] sm:$0xf]
    %v75 = vld [vmem:[#allocation3 + $0x10] sm:$0xf]
    %v76 = vld [vmem:[#allocation3 + $0x14] sm:$0xf]
    %v77 = vld [vmem:[#allocation3 + $0x18] sm:$0xf]
    %v78 = vld [vmem:[#allocation3 + $0x1c] sm:$0xf]
    %v79 = vld [vmem:[#allocation3 + $0x20] sm:$0xf]
    %v80 = vld [vmem:[#allocation3 + $0x24] sm:$0xf]
    %v81 = vld [vmem:[#allocation6] sm:$0xf]
    %v82 = vld [vmem:[#allocation6 + $0x4] sm:$0xf]
    %v83 = vld [vmem:[#allocation6 + $0x8] sm:$0xf]
    %v84 = vld [vmem:[#allocation6 + $0xc] sm:$0xf]
    %v85 = vld [vmem:[#allocation6 + $0x10] sm:$0xf]
    %v86 = vld [vmem:[#allocation6 + $0x14] sm:$0xf]
    %v87 = vld [vmem:[#allocation6 + $0x18] sm:$0xf]
    %v88 = vld [vmem:[#allocation6 + $0x1c] sm:$0xf]
    %v89 = vld [vmem:[#allocation6 + $0x20] sm:$0xf]
    %v90 = vld [vmem:[#allocation6 + $0x24] sm:$0xf]
    %v91 = vld [vmem:[#allocation6 + $0x28] sm:$0xf]
    %v92 = vld [vmem:[#allocation6 + $0x2c] sm:$0xf]
    %v93 = vld [vmem:[#allocation6 + $0x30] sm:$0xf]
    %v94 = vld [vmem:[#allocation6 + $0x34] sm:$0xf]
    %v95 = vld [vmem:[#allocation6 + $0x38] sm:$0xf]
    %v96 = vld [vmem:[#allocation6 + $0x3c] sm:$0xf]
    %v107 = vunpack.c.l.b16 %v71
    %v108 = vunpack.c.l.b16 %v72
    %v109 = vunpack.c.l.b16 %v73
    %v110 = vunpack.c.l.b16 %v74
    %v111 = vunpack.c.l.b16 %v75
    %v112 = vunpack.c.l.b16 %v76
    %v113 = vunpack.c.l.b16 %v77
    %v114 = vunpack.c.l.b16 %v78
    %v115 = vunpack.c.l.b16 %v79
    %v116 = vunpack.c.l.b16 %v80
    %v117 = vpack.c.b16 %v108, %v107
    %v118 = vpack.c.b16 %v110, %v109
    %v119 = vpack.c.b16 %v112, %v111
    %v120 = vpack.c.b16 %v114, %v113
    %v121 = vpack.c.b16 %v116, %v115
    %v143 = vunpack.c.l.b16 %v81
    %v144 = vunpack.c.l.b16 %v82
    %v145 = vunpack.c.l.b16 %v83
    %v146 = vunpack.c.l.b16 %v84
    %v147 = vunpack.c.l.b16 %v85
    %v148 = vunpack.c.l.b16 %v86
    %v149 = vunpack.c.l.b16 %v87
    %v150 = vunpack.c.l.b16 %v88
    %v151 = vunpack.c.l.b16 %v89
    %v152 = vunpack.c.l.b16 %v90
    %v153 = vunpack.c.l.b16 %v91
    %v154 = vunpack.c.l.b16 %v92
    %v155 = vunpack.c.l.b16 %v93
    %v156 = vunpack.c.l.b16 %v94
    %v157 = vunpack.c.l.b16 %v95
    %v158 = vunpack.c.l.b16 %v96
    %v159 = vpack.c.b16 %v144, %v143
    %v160 = vpack.c.b16 %v146, %v145
    %v161 = vpack.c.b16 %v148, %v147
    %v162 = vpack.c.b16 %v150, %v149
    %v163 = vpack.c.b16 %v152, %v151
    %v164 = vpack.c.b16 %v154, %v153
    %v165 = vpack.c.b16 %v156, %v155
    %v166 = vpack.c.b16 %v158, %v157
    %175 = vmatpush.bf16.msra.mxu0 %v166
    %176 = vmatpush.bf16.msra.mxu0 %v165
    %177 = vmatpush.bf16.msra.mxu0 %v164
    %178 = vmatpush.bf16.msra.mxu0 %v163
    %179 = vmatpush.bf16.msra.mxu0 %v162
    %180 = vmatpush.bf16.msra.mxu0 %v161
    %181 = vmatpush.bf16.msra.mxu0 %v160
    %182 = vmatpush.bf16.msra.mxu0 %v159
    %183 = vmatmul.bf16.gmra.mxu0 %v117
    %v184 = vpop.f32.mrf.mxu0
    %v185 = vadd.f32 0.0, %v184
    %v186 = vpop.f32.mrf.mxu0
    %v187 = vadd.f32 0.0, %v186
    %188 = vmatmul.bf16.gmra.mxu0 %v118
    %v189 = vpop.f32.mrf.mxu0
    %v190 = vadd.f32 0.0, %v189
    %v191 = vpop.f32.mrf.mxu0
    %v192 = vadd.f32 0.0, %v191
    %193 = vmatmul.bf16.gmra.mxu0 %v119
    %v194 = vpop.f32.mrf.mxu0
    %v195 = vadd.f32 0.0, %v194
    %v196 = vpop.f32.mrf.mxu0
    %v197 = vadd.f32 0.0, %v196
    %198 = vmatmul.bf16.gmra.mxu0 %v120
    %v199 = vpop.f32.mrf.mxu0
    %v200 = vadd.f32 0.0, %v199
    %v201 = vpop.f32.mrf.mxu0
    %v202 = vadd.f32 0.0, %v201
    %203 = vmatmul.bf16.gmra.mxu0 %v121
    %v204 = vpop.f32.mrf.mxu0
    %v205 = vadd.f32 0.0, %v204
    %v206 = vpop.f32.mrf.mxu0
    %v207 = vadd.f32 0.0, %v206
    %208 = vdwg.mxu0
    %v209 = vadd.f32 %v61, %v185
    %v210 = vadd.f32 %v62, %v187
    %v211 = vadd.f32 %v63, %v190
    %v212 = vadd.f32 %v64, %v192
    %v213 = vadd.f32 %v65, %v195
    %v214 = vadd.f32 %v66, %v197
    %v215 = vadd.f32 %v67, %v200
    %v216 = vadd.f32 %v68, %v202
    %v217 = vadd.f32 %v69, %v205
    %v218 = vadd.f32 %v70, %v207
    %219 = vst [vmem:[#allocation2] sm:$0xff] %v209
    %220 = vst [vmem:[#allocation2 + $0x8] sm:$0xff] %v210
    %221 = vst [vmem:[#allocation2 + $0x10] sm:$0xff] %v211
    %222 = vst [vmem:[#allocation2 + $0x18] sm:$0xff] %v212
    %223 = vst [vmem:[#allocation2 + $0x20] sm:$0xff] %v213
    %224 = vst [vmem:[#allocation2 + $0x28] sm:$0xff] %v214
    %225 = vst [vmem:[#allocation2 + $0x30] sm:$0xff] %v215
    %226 = vst [vmem:[#allocation2 + $0x38] sm:$0xff] %v216
    %227 = vst [vmem:[#allocation2 + $0x40] sm:$0xff] %v217
    %228 = vst [vmem:[#allocation2 + $0x48] sm:$0xff] %v218
    // Predicated region
    $region26: #{tpu_custom_call.1} parent=1 // pred_check
      %p229 = pneg %p47
    $region27: #{tpu_custom_call.1} parent=1 // pred_check_branch
      %231 = sbr.rel (%p229) target = $region29
    $region28: #{tpu_custom_call.1} parent=1 // pred_region
      %v232 = vld [vmem:[#allocation2] sm:$0xff]
      %v233 = vld [vmem:[#allocation2 + $0x8] sm:$0xff]
      %v234 = vld [vmem:[#allocation2 + $0x10] sm:$0xff]
      %v235 = vld [vmem:[#allocation2 + $0x18] sm:$0xff]
      %v236 = vld [vmem:[#allocation2 + $0x20] sm:$0xff]
      %v237 = vld [vmem:[#allocation2 + $0x28] sm:$0xff]
      %v238 = vld [vmem:[#allocation2 + $0x30] sm:$0xff]
      %v239 = vld [vmem:[#allocation2 + $0x38] sm:$0xff]
      %v240 = vld [vmem:[#allocation2 + $0x40] sm:$0xff]
      %v241 = vld [vmem:[#allocation2 + $0x48] sm:$0xff]
      %v242 = vld [vmem:[%s2] sm:$0x1]
      %v244 = vperm.slane %v242, 0
      %v246 = vadd.f32 %v232, %v244
      %v247 = vadd.f32 %v233, %v244
      %v248 = vadd.f32 %v234, %v244
      %v249 = vadd.f32 %v235, %v244
      %v250 = vadd.f32 %v236, %v244
      %v251 = vadd.f32 %v237, %v244
      %v252 = vadd.f32 %v238, %v244
      %v253 = vadd.f32 %v239, %v244
      %v254 = vadd.f32 %v240, %v244
      %v255 = vadd.f32 %v241, %v244
      %256 = vst [vmem:[#allocation8] sm:$0xff] %v246
      %257 = vst [vmem:[#allocation8 + $0x8] sm:$0xff] %v247
      %258 = vst [vmem:[#allocation8 + $0x10] sm:$0xff] %v248
      %259 = vst [vmem:[#allocation8 + $0x18] sm:$0xff] %v249
      %260 = vst [vmem:[#allocation8 + $0x20] sm:$0xff] %v250
      %261 = vst [vmem:[#allocation8 + $0x28] sm:$0xff] %v251
      %262 = vst [vmem:[#allocation8 + $0x30] sm:$0xff] %v252
      %263 = vst [vmem:[#allocation8 + $0x38] sm:$0xff] %v253
      %264 = vst [vmem:[#allocation8 + $0x40] sm:$0xff] %v254
      %265 = vst [vmem:[#allocation8 + $0x48] sm:$0xff] %v255
    $region29: #{tpu_custom_call.1} parent=1 // pred_fallthru
      _
    // Predicated region
    $region30: #{tpu_custom_call.1} parent=1 // pred_check
      _
    $region31: #{tpu_custom_call.1} parent=1 // pred_check_branch
      %267 = sbr.rel (0) target = $region33
    $region32: #{tpu_custom_call.1} parent=1 // pred_region
      %269 = vsyncadd [#allocation5], 0
      %s270 = sshll.u32 [#allocation8], 4
      %s271 = int_to_ptr.vmem [resolvable:$true] %s270
      %s272 = sshll.u32 %s3, 4
      %s273 = int_to_ptr.hbm [resolvable:$true] %s272
      %278 = dma.vmem_to_hbm [thread:$0]  %s271, 1280, %s273, [#allocation5], 128, 128, 8
    $region33: #{tpu_custom_call.1} parent=1 // pred_fallthru
      _
    // Predicated region
    $region34: #{tpu_custom_call.1} parent=1 // pred_check
      _
    $region35: #{tpu_custom_call.1} parent=1 // pred_check_branch
      %280 = sbr.rel (0) target = $region37
    $region36: #{tpu_custom_call.1} parent=1 // pred_region
      %282 = dma.done [#allocation5], 1280
    $region37: #{tpu_custom_call.1} parent=1 // pred_fallthru
      _
    %283 = vsyncpa [#allocation4], 1
    %284 = vsyncpa [#allocation7], 1
    %285 = vsyncpa [#allocation5], 1

</llo_original>
